<compile_context>
chip_gen: v6e
topology: v6e:2x2x1
jax: 0.10.0
libtpu: 0.0.40
codegen_flags: <defaults>
</compile_context>

<pallas_src>
import numpy as np
import jax
import jax.numpy as jnp
from jax.experimental import pallas as pl
from jax.experimental.pallas import tpu as pltpu

KERNEL_SIZE = 11
KERNEL_SIGMA = 1.5
K1 = 0.01
K2 = 0.03


def _gaussian_1d(kernel_size=KERNEL_SIZE, sigma=KERNEL_SIGMA):
    # piq's 2-D gaussian is separable: outer(g, g) with g normalized below.
    coords = np.arange(kernel_size, dtype=np.float32)
    coords -= (kernel_size - 1) / 2.0
    g = np.exp(-(coords ** 2) / np.float32(2.0 * sigma * sigma)).astype(np.float32)
    g /= g.sum()
    return g


def _toeplitz_1d(n, taps):
    # Banded Toeplitz so that (img @ T)[r, t] = sum_j taps[j] * img[r, t + j].
    k = len(taps)
    on = n - k + 1
    t = np.zeros((n, on), dtype=np.float32)
    for col in range(on):
        t[col:col + k, col] = taps
    return t


def _block_toeplitz_2d(h, w):
    # kron(T_h, T_w) maps a flattened (h*w,) image to the flattened (oh*ow,) valid
    # convolution with outer(g, g):  (img @ T2d)[i*ow + j] = sum_{a,b} g[a] g[b] img[i+a, j+b]
    g = _gaussian_1d()
    return np.kron(_toeplitz_1d(h, g), _toeplitz_1d(w, g)).astype(np.float32)


def _vmem_budget_bytes():
    # Generation-aware per-tile working-set budget.  v7x has 64 MiB physical VMEM per
    # TensorCore (vs 128 MiB on v5e/v6e); keep the tile (inputs double-buffered +
    # every padded intermediate) comfortably inside the scoped limit everywhere.
    cap = 64 * 1024 * 1024
    try:
        info = pltpu.get_tpu_info()
        for name in ("vmem_capacity_bytes", "vmem_size_bytes", "vmem_bytes"):
            v = getattr(info, name, None)
            if v:
                cap = int(v)
                break
    except Exception:
        pass
    return max(8 * 1024 * 1024, min(cap // 3, 24 * 1024 * 1024))


def _pick_tile(bc, hw, oo):
    # Count the real (lane-padded) f32 footprint per bc-row inside one tile:
    #   width-hw buffers : 2 inputs x 2 (double buffer) + clipped x,y + diff/sq + xx,yy,xy ~ 11-13
    #   width-oo buffers : 5 conv outputs + mu products + num/den/ss temporaries ~ 13-14
    oo_pad = ((oo + 127) // 128) * 128
    per_row = 4 * (13 * hw + 14 * oo_pad)
    budget = _vmem_budget_bytes()
    tb = max(8, budget // per_row)
    tb -= tb % 8
    tb = int(min(tb, 1024))
    bc8 = ((bc + 7) // 8) * 8          # keep tb a multiple of 8 (row-group reshape)
    tb = min(tb, bc8)
    num_tiles = -(-bc8 // tb)
    padded_bc = num_tiles * tb
    return tb, num_tiles, padded_bc


def _make_combined_loss_kernel(tb, hw, oo):
    c1 = K1 * K1
    c2 = K2 * K2

    def kernel(x_ref, y_ref, t2_ref, mse_ref, ssim_ref):
        x = jnp.clip(x_ref[...], 0.0, 1.0)          # (tb, hw) lane-dense
        y = jnp.clip(y_ref[...], 0.0, 1.0)

        # ---- MSE partial: reduce over row-groups of 8 with pure vreg adds; the
        # cross-sublane / cross-lane reduction happens outside the kernel. ----
        diff = x - y
        sq = diff * diff
        mse_part = jnp.sum(sq.reshape(tb // 8, 8, hw), axis=0)          # (8, hw)
        mse_ref[...] = mse_part.reshape(1, 8, hw)

        # ---- SSIM: one block-Toeplitz MXU matmul per filter input (K = hw). ----
        t2 = t2_ref[...]                                                 # (hw, oo)

        def gconv(img):
            return jnp.dot(img, t2, preferred_element_type=jnp.float32)  # (tb, oo)

        mu_x = gconv(x)
        mu_y = gconv(y)
        e_xx = gconv(x * x)
        e_yy = gconv(y * y)
        e_xy = gconv(x * y)

        mu_xx = mu_x * mu_x
        mu_yy = mu_y * mu_y
        mu_xy = mu_x * mu_y
        # Fused single-division SSIM map (exactly piq's formula, one divide).
        num = (2.0 * mu_xy + c1) * (2.0 * (e_xy - mu_xy) + c2)
        den = (mu_xx + mu_yy + c1) * ((e_xx - mu_xx) + (e_yy - mu_yy) + c2)
        ss = num / den                                                   # (tb, oo)
        ssim_part = jnp.sum(ss.reshape(tb // 8, 8, oo), axis=0)          # (8, oo)
        ssim_ref[...] = ssim_part.reshape(1, 8, oo)

    return kernel


def combined_loss(logit_alpha, reconstructed, target):
    b, c, h, w = reconstructed.shape
    assert h >= KERNEL_SIZE and w >= KERNEL_SIZE, "image smaller than SSIM kernel"
    oh = h - KERNEL_SIZE + 1
    ow = w - KERNEL_SIZE + 1
    hw = h * w
    oo = oh * ow
    # TODO(synk): piq.ssim average-pool downsample for min(H, W) >= ~384 is not
    # replicated, and the 2D block-Toeplitz needs a separable fallback for large H, W.
    if hw * oo * 4 > 4 * 1024 * 1024:
        raise NotImplementedError("block-Toeplitz SSIM path is sized for small images")

    bc = b * c
    tb, num_tiles, padded_bc = _pick_tile(bc, hw, oo)

    xr = reconstructed.reshape(bc, hw).astype(jnp.float32)
    yr = target.reshape(bc, hw).astype(jnp.float32)
    if padded_bc != bc:
        pad = ((0, padded_bc - bc), (0, 0))
        xr = jnp.pad(xr, pad)     # zero rows contribute 0 to MSE and exactly 1.0/px to SSIM
        yr = jnp.pad(yr, pad)

    t2d = jnp.asarray(_block_toeplitz_2d(h, w))

    flops = (2 * 5 * padded_bc * hw * oo        # five block-Toeplitz matmuls
             + 25 * padded_bc * oo              # SSIM map elementwise
             + 8 * padded_bc * hw)              # clip, diff, squares, products
    bytes_accessed = (2 * padded_bc * hw * 4 + hw * oo * 4
                      + num_tiles * (8 * hw + 8 * oo) * 4)

    mse_parts, ssim_parts = pl.pallas_call(
        _make_combined_loss_kernel(tb, hw, oo),
        out_shape=(jax.ShapeDtypeStruct((num_tiles, 8, hw), jnp.float32),
                   jax.ShapeDtypeStruct((num_tiles, 8, oo), jnp.float32)),
        grid=(num_tiles,),
        in_specs=[
            pl.BlockSpec((tb, hw), lambda i: (i, 0)),     # reconstructed tile
            pl.BlockSpec((tb, hw), lambda i: (i, 0)),     # target tile
            pl.BlockSpec((hw, oo), lambda i: (0, 0)),     # 2D block-Toeplitz filter
        ],
        out_specs=(
            pl.BlockSpec((1, 8, hw), lambda i: (i, 0, 0)),
            pl.BlockSpec((1, 8, oo), lambda i: (i, 0, 0)),
        ),
        compiler_params=pltpu.CompilerParams(
            dimension_semantics=("parallel",),            # per-tile partials -> megacore OK
            vmem_limit_bytes=40 * 1024 * 1024,            # < v7x's 64 MiB physical VMEM
        ),
        cost_estimate=pl.CostEstimate(
            flops=int(flops),
            transcendentals=int(padded_bc * oo),
            bytes_accessed=int(bytes_accessed)),
    )(xr, yr, t2d)

    # Tiny epilogue in plain JAX: final cross-tile / cross-lane reduce + blend.
    inv_n_px = 1.0 / float(bc * h * w)
    inv_n_ss = 1.0 / float(bc * oh * ow)
    pad_corr = float((padded_bc - bc) * oo)   # each zero-padded row gives exactly 1.0/px
    mse = jnp.sum(mse_parts) * inv_n_px
    ssim_loss = 1.0 - (jnp.sum(ssim_parts) - pad_corr) * inv_n_ss
    alpha = jax.nn.sigmoid(jnp.asarray(logit_alpha, jnp.float32))
    return alpha * mse + (1.0 - alpha) * ssim_loss


# ---------- pure-JAX reference (same math, no Pallas) for verification ----------
def _reference_combined_loss(logit_alpha, reconstructed, target):
    b, c, h, w = reconstructed.shape
    oh = h - KERNEL_SIZE + 1
    ow = w - KERNEL_SIZE + 1
    x = jnp.clip(reconstructed.reshape(b * c, h, w).astype(jnp.float32), 0.0, 1.0)
    y = jnp.clip(target.reshape(b * c, h, w).astype(jnp.float32), 0.0, 1.0)

    k1d = jnp.asarray(_gaussian_1d(), jnp.float32)

    def gconv(img):
        tmp = sum(k1d[j] * img[:, :, j:j + ow] for j in range(KERNEL_SIZE))
        out = sum(k1d[i] * tmp[:, i:i + oh, :] for i in range(KERNEL_SIZE))
        return out

    mse = jnp.mean((x - y) ** 2)
    mu_x, mu_y = gconv(x), gconv(y)
    mu_xx, mu_yy, mu_xy = mu_x * mu_x, mu_y * mu_y, mu_x * mu_y
    s_xx = gconv(x * x) - mu_xx
    s_yy = gconv(y * y) - mu_yy
    s_xy = gconv(x * y) - mu_xy
    c1, c2 = K1 * K1, K2 * K2
    cs = (2.0 * s_xy + c2) / (s_xx + s_yy + c2)
    ss = (2.0 * mu_xy + c1) / (mu_xx + mu_yy + c1) * cs
    ssim_loss = 1.0 - jnp.mean(ss)
    alpha = jax.nn.sigmoid(jnp.asarray(logit_alpha, jnp.float32))
    return alpha * mse + (1.0 - alpha) * ssim_loss


if __name__ == "__main__":
    # Deterministic parameter init: initial_alpha = 0.5 -> logit_alpha = log(1) = 0
    initial_alpha = 0.5
    logit_alpha = jnp.float32(np.log(initial_alpha / (1.0 - initial_alpha)))

    key = jax.random.PRNGKey(0)
    k1, k2 = jax.random.split(key)
    B, C, H, W = 2, 4, 16, 16
    reconstructed = jax.random.uniform(k1, (B, C, H, W), dtype=jnp.float32)
    target = jax.random.uniform(k2, (B, C, H, W), dtype=jnp.float32)

    loss = jax.block_until_ready(combined_loss(logit_alpha, reconstructed, target))
    ref = jax.block_until_ready(
        _reference_combined_loss(logit_alpha, reconstructed, target))
    np.testing.assert_allclose(np.asarray(loss), np.asarray(ref),
                               rtol=5e-5, atol=1e-6)

    print("KERNEL_OK")
</pallas_src>

<mosaic_0001>
module attributes {stable_mosaic.version = 11 : i64} {
  func.func @kernel(%arg0: i32, %arg1: memref<8x256xf32, #tpu.memory_space<vmem>>, %arg2: memref<8x256xf32, #tpu.memory_space<vmem>>, %arg3: memref<256x36xf32, #tpu.memory_space<vmem>>, %arg4: memref<1x8x256xf32, #tpu.memory_space<vmem>>, %arg5: memref<1x8x36xf32, #tpu.memory_space<vmem>>) attributes {dimension_semantics = [#tpu.dimension_semantics<parallel>], iteration_bounds = array<i64: 1>, scalar_prefetch = 0 : i64, scratch_operands = 0 : i64, tpu.core_type = #tpu.core_type<tc>, window_params = [{transform_indices = @transform_0, window_bounds = array<i64: 8, 256>}, {transform_indices = @transform_1, window_bounds = array<i64: 8, 256>}, {pipeline_mode = #tpu.pipeline_mode<synchronous>, transform_indices = @transform_2, window_bounds = array<i64: 256, 36>}, {transform_indices = @transform_3, window_bounds = array<i64: 1, 8, 256>}, {transform_indices = @transform_4, window_bounds = array<i64: 1, 8, 36>}]} {
    %c0 = arith.constant 0 : index
    %c0_0 = arith.constant 0 : index
    %0 = vector.load %arg1[%c0, %c0_0] : memref<8x256xf32, #tpu.memory_space<vmem>>, vector<8x256xf32>
    %cst = arith.constant 0.000000e+00 : f32
    %cst_1 = arith.constant 1.000000e+00 : f32
    %1 = vector.broadcast %cst : f32 to vector<8x256xf32>
    %2 = arith.maximumf %1, %0 : vector<8x256xf32>
    %3 = vector.broadcast %cst_1 : f32 to vector<8x256xf32>
    %4 = arith.minimumf %3, %2 : vector<8x256xf32>
    %c0_2 = arith.constant 0 : index
    %c0_3 = arith.constant 0 : index
    %5 = vector.load %arg2[%c0_2, %c0_3] : memref<8x256xf32, #tpu.memory_space<vmem>>, vector<8x256xf32>
    %cst_4 = arith.constant 0.000000e+00 : f32
    %cst_5 = arith.constant 1.000000e+00 : f32
    %6 = vector.broadcast %cst_4 : f32 to vector<8x256xf32>
    %7 = arith.maximumf %6, %5 : vector<8x256xf32>
    %8 = vector.broadcast %cst_5 : f32 to vector<8x256xf32>
    %9 = arith.minimumf %8, %7 : vector<8x256xf32>
    %10 = arith.subf %4, %9 : vector<8x256xf32>
    %11 = arith.mulf %10, %10 : vector<8x256xf32>
    %12 = vector.shape_cast %11 : vector<8x256xf32> to vector<1x8x256xf32>
    %cst_6 = arith.constant dense<0.000000e+00> : vector<8x256xf32>
    %13 = vector.multi_reduction <add>, %12, %cst_6 [0] : vector<1x8x256xf32> to vector<8x256xf32>
    %14 = vector.shape_cast %13 : vector<8x256xf32> to vector<1x8x256xf32>
    %c0_7 = arith.constant 0 : index
    %c0_8 = arith.constant 0 : index
    %c0_9 = arith.constant 0 : index
    %15 = vector.load %arg4[%c0_7, %c0_8, %c0_9] : memref<1x8x256xf32, #tpu.memory_space<vmem>>, vector<1x8x256xf32>
    tpu.vector_store %arg4[%c0_7, %c0_8, %c0_9], %14 {strides = array<i32>} : memref<1x8x256xf32, #tpu.memory_space<vmem>>, vector<1x8x256xf32>,
    %c0_10 = arith.constant 0 : index
    %c0_11 = arith.constant 0 : index
    %16 = vector.load %arg3[%c0_10, %c0_11] : memref<256x36xf32, #tpu.memory_space<vmem>>, vector<256x36xf32>
    %cst_12 = arith.constant dense<0.000000e+00> : vector<8x36xf32>
    %17 = tpu.matmul %4, %16, %cst_12 {dimension_numbers = #tpu.dot_dimension_numbers<[1], [0], [0], [1], [0, 0, 1, 1], [], []>} : vector<8x256xf32>, vector<256x36xf32>, vector<8x36xf32> -> vector<8x36xf32>
    %cst_13 = arith.constant dense<0.000000e+00> : vector<8x36xf32>
    %18 = tpu.matmul %9, %16, %cst_13 {dimension_numbers = #tpu.dot_dimension_numbers<[1], [0], [0], [1], [0, 0, 1, 1], [], []>} : vector<8x256xf32>, vector<256x36xf32>, vector<8x36xf32> -> vector<8x36xf32>
    %19 = arith.mulf %4, %4 : vector<8x256xf32>
    %cst_14 = arith.constant dense<0.000000e+00> : vector<8x36xf32>
    %20 = tpu.matmul %19, %16, %cst_14 {dimension_numbers = #tpu.dot_dimension_numbers<[1], [0], [0], [1], [0, 0, 1, 1], [], []>} : vector<8x256xf32>, vector<256x36xf32>, vector<8x36xf32> -> vector<8x36xf32>
    %21 = arith.mulf %9, %9 : vector<8x256xf32>
    %cst_15 = arith.constant dense<0.000000e+00> : vector<8x36xf32>
    %22 = tpu.matmul %21, %16, %cst_15 {dimension_numbers = #tpu.dot_dimension_numbers<[1], [0], [0], [1], [0, 0, 1, 1], [], []>} : vector<8x256xf32>, vector<256x36xf32>, vector<8x36xf32> -> vector<8x36xf32>
    %23 = arith.mulf %4, %9 : vector<8x256xf32>
    %cst_16 = arith.constant dense<0.000000e+00> : vector<8x36xf32>
    %24 = tpu.matmul %23, %16, %cst_16 {dimension_numbers = #tpu.dot_dimension_numbers<[1], [0], [0], [1], [0, 0, 1, 1], [], []>} : vector<8x256xf32>, vector<256x36xf32>, vector<8x36xf32> -> vector<8x36xf32>
    %25 = arith.mulf %17, %17 : vector<8x36xf32>
    %26 = arith.mulf %18, %18 : vector<8x36xf32>
    %27 = arith.mulf %17, %18 : vector<8x36xf32>
    %cst_17 = arith.constant 2.000000e+00 : f32
    %28 = vector.broadcast %cst_17 : f32 to vector<8x36xf32>
    %29 = arith.mulf %28, %27 : vector<8x36xf32>
    %cst_18 = arith.constant 9.99999974E-5 : f32
    %30 = vector.broadcast %cst_18 : f32 to vector<8x36xf32>
    %31 = arith.addf %29, %30 : vector<8x36xf32>
    %32 = arith.subf %24, %27 : vector<8x36xf32>
    %cst_19 = arith.constant 2.000000e+00 : f32
    %33 = vector.broadcast %cst_19 : f32 to vector<8x36xf32>
    %34 = arith.mulf %33, %32 : vector<8x36xf32>
    %cst_20 = arith.constant 8.99999984E-4 : f32
    %35 = vector.broadcast %cst_20 : f32 to vector<8x36xf32>
    %36 = arith.addf %34, %35 : vector<8x36xf32>
    %37 = arith.mulf %31, %36 : vector<8x36xf32>
    %38 = arith.addf %25, %26 : vector<8x36xf32>
    %cst_21 = arith.constant 9.99999974E-5 : f32
    %39 = vector.broadcast %cst_21 : f32 to vector<8x36xf32>
    %40 = arith.addf %38, %39 : vector<8x36xf32>
    %41 = arith.subf %20, %25 : vector<8x36xf32>
    %42 = arith.subf %22, %26 : vector<8x36xf32>
    %43 = arith.addf %41, %42 : vector<8x36xf32>
    %cst_22 = arith.constant 8.99999984E-4 : f32
    %44 = vector.broadcast %cst_22 : f32 to vector<8x36xf32>
    %45 = arith.addf %43, %44 : vector<8x36xf32>
    %46 = arith.mulf %40, %45 : vector<8x36xf32>
    %47 = arith.divf %37, %46 : vector<8x36xf32>
    %48 = vector.shape_cast %47 : vector<8x36xf32> to vector<1x8x36xf32>
    %cst_23 = arith.constant dense<0.000000e+00> : vector<8x36xf32>
    %49 = vector.multi_reduction <add>, %48, %cst_23 [0] : vector<1x8x36xf32> to vector<8x36xf32>
    %50 = vector.shape_cast %49 : vector<8x36xf32> to vector<1x8x36xf32>
    %c0_24 = arith.constant 0 : index
    %c0_25 = arith.constant 0 : index
    %c0_26 = arith.constant 0 : index
    %51 = vector.load %arg5[%c0_24, %c0_25, %c0_26] : memref<1x8x36xf32, #tpu.memory_space<vmem>>, vector<1x8x36xf32>
    tpu.vector_store %arg5[%c0_24, %c0_25, %c0_26], %50 {strides = array<i32>} : memref<1x8x36xf32, #tpu.memory_space<vmem>>, vector<1x8x36xf32>,
    return
  }
  func.func @transform_0(%arg0: i32) -> (i32, i32) {
    %c0_i32 = arith.constant 0 : i32
    %c0_i32_0 = arith.constant 0 : i32
    return %arg0, %c0_i32 : i32, i32
  }
  func.func @transform_1(%arg0: i32) -> (i32, i32) {
    %c0_i32 = arith.constant 0 : i32
    %c0_i32_0 = arith.constant 0 : i32
    return %arg0, %c0_i32 : i32, i32
  }
  func.func @transform_2(%arg0: i32) -> (i32, i32) {
    %c0_i32 = arith.constant 0 : i32
    %c0_i32_0 = arith.constant 0 : i32
    %c0_i32_1 = arith.constant 0 : i32
    return %c0_i32, %c0_i32_0 : i32, i32
  }
  func.func @transform_3(%arg0: i32) -> (i32, i32, i32) {
    %c0_i32 = arith.constant 0 : i32
    %c0_i32_0 = arith.constant 0 : i32
    %c0_i32_1 = arith.constant 0 : i32
    return %arg0, %c0_i32, %c0_i32_0 : i32, i32, i32
  }
  func.func @transform_4(%arg0: i32) -> (i32, i32, i32) {
    %c0_i32 = arith.constant 0 : i32
    %c0_i32_0 = arith.constant 0 : i32
    %c0_i32_1 = arith.constant 0 : i32
    return %arg0, %c0_i32, %c0_i32_0 : i32, i32, i32
  }
}

</mosaic_0001>

<llo_original>
// kernel: tpu_custom_call.1
$region0: #{tpu_custom_call.1}
  #allocation0 [shape = 'u32[]', space=smem, size = 0x4, offset = 0x4, fixed_abs, tag = 'smem constant byte address 0x4 - core index']
  #allocation1 [shape = 'u32[144,128]{1,0:T(1,128)}', space=vmem, size = 0x12000, scoped, tag = 'internal scratch']
  %s0 = inlined_call_operand.vmem [shape: f32[8,256], index: 0, kind: input, shape index: {}]
  %s1 = inlined_call_operand.vmem [shape: f32[8,256], index: 1, kind: input, shape index: {}]
  %s2 = inlined_call_operand.vmem [shape: f32[256,36], index: 2, kind: input, shape index: {}]
  %s3 = inlined_call_operand.hbm [shape: f32[1,8,256], index: 3, kind: output, shape index: {0}]
  %s4 = inlined_call_operand.hbm [shape: f32[1,8,36], index: 4, kind: output, shape index: {1}]
  %5 = xla_tuple %s3, %s4
  %s6 = sld [smem:[#allocation0]]
  $region30: #{tpu_custom_call.1} parent=0
    _
  %s8 = ssub.s32 1, %s6
  %s9 = scalar_select 0, %s8, %s6
  $region1: #{tpu_custom_call.1} parent=0
    #allocation2 [shape = 'u8[8192]{0}', space=vmem, size = 0x2000, scoped, tag = 'output window, operand 0, single buffered']
    #allocation3 [shape = 's32[1]{0}', space=sflag, size = 0x4, scoped, tag = 'scoped memory for tpu_custom_call.1']
    #allocation4 [shape = 'u8[4096]{0}', space=vmem, size = 0x1000, scoped, tag = 'output window, operand 1, single buffered']
    #allocation5 [shape = 's32[1]{0}', space=sflag, size = 0x4, scoped, tag = 'scoped memory for tpu_custom_call.1']
    %10 = vsyncpa [#allocation3], 0
    %11 = vsyncpa [#allocation5], 0
    // Predicated region
    $region2: #{tpu_custom_call.1} parent=1 // pred_check
      _
    $region3: #{tpu_custom_call.1} parent=1 // pred_check_branch
      %13 = sbr.rel (0) target = $region5
    $region4: #{tpu_custom_call.1} parent=1 // pred_region
      _
    $region5: #{tpu_custom_call.1} parent=1 // pred_fallthru
      _
    // Predicated region
    $region6: #{tpu_custom_call.1} parent=1 // pred_check
      _
    $region7: #{tpu_custom_call.1} parent=1 // pred_check_branch
      %15 = sbr.rel (0) target = $region9
    $region8: #{tpu_custom_call.1} parent=1 // pred_region
      _
    $region9: #{tpu_custom_call.1} parent=1 // pred_fallthru
      _
    // Predicated region
    $region10: #{tpu_custom_call.1} parent=1 // pred_check
      _
    $region11: #{tpu_custom_call.1} parent=1 // pred_check_branch
      %17 = sbr.rel (0) target = $region13
    $region12: #{tpu_custom_call.1} parent=1 // pred_region
      _
    $region13: #{tpu_custom_call.1} parent=1 // pred_fallthru
      _
    %v18 = vld [vmem:[%s0] sm:$0xff]
    %v19 = vld [vmem:[%s0 + $0x8] sm:$0xff]
    %v20 = vmax.f32 %v18, 0.0
    %v21 = vmax.f32 %v19, 0.0
    %v22 = vmin.f32 %v20, 1.0
    %v23 = vmin.f32 %v21, 1.0
    %v24 = vld [vmem:[%s1] sm:$0xff]
    %v25 = vld [vmem:[%s1 + $0x8] sm:$0xff]
    %v26 = vmax.f32 %v24, 0.0
    %v27 = vmax.f32 %v25, 0.0
    %v28 = vmin.f32 %v26, 1.0
    %v29 = vmin.f32 %v27, 1.0
    %v30 = vsub.f32 %v22, %v28
    %v31 = vsub.f32 %v23, %v29
    %v32 = vmul.f32 %v30, %v30
    %v33 = vmul.f32 %v31, %v31
    %v34 = vadd.f32 %v32, 0.0
    %v35 = vadd.f32 %v33, 0.0
    %36 = vst [vmem:[#allocation2] sm:$0xff] %v34
    %37 = vst [vmem:[#allocation2 + $0x8] sm:$0xff] %v35
    %v38 = vld [vmem:[%s2] sm:$0xff]
    %v39 = vld [vmem:[%s2 + $0x8] sm:$0xff]
    %v40 = vld [vmem:[%s2 + $0x10] sm:$0xff]
    %v41 = vld [vmem:[%s2 + $0x18] sm:$0xff]
    %v42 = vld [vmem:[%s2 + $0x20] sm:$0xff]
    %v43 = vld [vmem:[%s2 + $0x28] sm:$0xff]
    %v44 = vld [vmem:[%s2 + $0x30] sm:$0xff]
    %v45 = vld [vmem:[%s2 + $0x38] sm:$0xff]
    %v46 = vld [vmem:[%s2 + $0x40] sm:$0xff]
    %v47 = vld [vmem:[%s2 + $0x48] sm:$0xff]
    %v48 = vld [vmem:[%s2 + $0x50] sm:$0xff]
    %v49 = vld [vmem:[%s2 + $0x58] sm:$0xff]
    %v50 = vld [vmem:[%s2 + $0x60] sm:$0xff]
    %v51 = vld [vmem:[%s2 + $0x68] sm:$0xff]
    %v52 = vld [vmem:[%s2 + $0x70] sm:$0xff]
    %v53 = vld [vmem:[%s2 + $0x78] sm:$0xff]
    %v54 = vld [vmem:[%s2 + $0x80] sm:$0xff]
    %v55 = vld [vmem:[%s2 + $0x88] sm:$0xff]
    %v56 = vld [vmem:[%s2 + $0x90] sm:$0xff]
    %v57 = vld [vmem:[%s2 + $0x98] sm:$0xff]
    %v58 = vld [vmem:[%s2 + $0xa0] sm:$0xff]
    %v59 = vld [vmem:[%s2 + $0xa8] sm:$0xff]
    %v60 = vld [vmem:[%s2 + $0xb0] sm:$0xff]
    %v61 = vld [vmem:[%s2 + $0xb8] sm:$0xff]
    %v62 = vld [vmem:[%s2 + $0xc0] sm:$0xff]
    %v63 = vld [vmem:[%s2 + $0xc8] sm:$0xff]
    %v64 = vld [vmem:[%s2 + $0xd0] sm:$0xff]
    %v65 = vld [vmem:[%s2 + $0xd8] sm:$0xff]
    %v66 = vld [vmem:[%s2 + $0xe0] sm:$0xff]
    %v67 = vld [vmem:[%s2 + $0xe8] sm:$0xff]
    %v68 = vld [vmem:[%s2 + $0xf0] sm:$0xff]
    %v69 = vld [vmem:[%s2 + $0xf8] sm:$0xff]
    %70 = vmatprep.subr.mxu0 0.0
    %71 = vmatpush1.msra.mxu0 %v53
    %72 = vmatprep.subr.mxu0 0.0
    %73 = vmatpush1.msra.mxu0 %v52
    %74 = vmatprep.subr.mxu0 0.0
    %75 = vmatpush1.msra.mxu0 %v51
    %76 = vmatprep.subr.mxu0 0.0
    %77 = vmatpush1.msra.mxu0 %v50
    %78 = vmatprep.subr.mxu0 0.0
    %79 = vmatpush1.msra.mxu0 %v49
    %80 = vmatprep.subr.mxu0 0.0
    %81 = vmatpush1.msra.mxu0 %v48
    %82 = vmatprep.subr.mxu0 0.0
    %83 = vmatpush1.msra.mxu0 %v47
    %84 = vmatprep.subr.mxu0 0.0
    %85 = vmatpush1.msra.mxu0 %v46
    %86 = vmatprep.subr.mxu0 0.0
    %87 = vmatpush1.msra.mxu0 %v45
    %88 = vmatprep.subr.mxu0 0.0
    %89 = vmatpush1.msra.mxu0 %v44
    %90 = vmatprep.subr.mxu0 0.0
    %91 = vmatpush1.msra.mxu0 %v43
    %92 = vmatprep.subr.mxu0 0.0
    %93 = vmatpush1.msra.mxu0 %v42
    %94 = vmatprep.subr.mxu0 0.0
    %95 = vmatpush1.msra.mxu0 %v41
    %96 = vmatprep.subr.mxu0 0.0
    %97 = vmatpush1.msra.mxu0 %v40
    %98 = vmatprep.subr.mxu0 0.0
    %99 = vmatpush1.msra.mxu0 %v39
    %100 = vmatprep.subr.mxu0 0.0
    %101 = vmatpush1.msra.mxu0 %v38
    %102 = vmatprep.subr.mxu0 0.0
    %103 = vmatpush2.msra.mxu0 %v69
    %104 = vmatprep.subr.mxu0 0.0
    %105 = vmatpush2.msra.mxu0 %v68
    %106 = vmatprep.subr.mxu0 0.0
    %107 = vmatpush2.msra.mxu0 %v67
    %108 = vmatprep.subr.mxu0 0.0
    %109 = vmatpush2.msra.mxu0 %v66
    %110 = vmatprep.subr.mxu0 0.0
    %111 = vmatpush2.msra.mxu0 %v65
    %112 = vmatprep.subr.mxu0 0.0
    %113 = vmatpush2.msra.mxu0 %v64
    %114 = vmatprep.subr.mxu0 0.0
    %115 = vmatpush2.msra.mxu0 %v63
    %116 = vmatprep.subr.mxu0 0.0
    %117 = vmatpush2.msra.mxu0 %v62
    %118 = vmatprep.subr.mxu0 0.0
    %119 = vmatpush2.msra.mxu0 %v61
    %120 = vmatprep.subr.mxu0 0.0
    %121 = vmatpush2.msra.mxu0 %v60
    %122 = vmatprep.subr.mxu0 0.0
    %123 = vmatpush2.msra.mxu0 %v59
    %124 = vmatprep.subr.mxu0 0.0
    %125 = vmatpush2.msra.mxu0 %v58
    %126 = vmatprep.subr.mxu0 0.0
    %127 = vmatpush2.msra.mxu0 %v57
    %128 = vmatprep.subr.mxu0 0.0
    %129 = vmatpush2.msra.mxu0 %v56
    %130 = vmatprep.subr.mxu0 0.0
    %131 = vmatpush2.msra.mxu0 %v55
    %132 = vmatprep.subr.mxu0 0.0
    %133 = vmatpush2.msra.mxu0 %v54
    %134 = vmatprep.mubr.f32.mxu0 %v23
    %135 = vmatmul.mubr.f32.gmra.mxu0 %v22
    %v136 = vpop.f32.mrf.mxu0
    %v137 = vadd.f32 0.0, %v136
    %v138 = vpop.f32.mrf.mxu0
    %139 = vdwg.mxu0
    %140 = vmatprep.subr.mxu0 0.0
    %141 = vmatpush1.msra.mxu0 %v53
    %142 = vmatprep.subr.mxu0 0.0
    %143 = vmatpush1.msra.mxu0 %v52
    %144 = vmatprep.subr.mxu0 0.0
    %145 = vmatpush1.msra.mxu0 %v51
    %146 = vmatprep.subr.mxu0 0.0
    %147 = vmatpush1.msra.mxu0 %v50
    %148 = vmatprep.subr.mxu0 0.0
    %149 = vmatpush1.msra.mxu0 %v49
    %150 = vmatprep.subr.mxu0 0.0
    %151 = vmatpush1.msra.mxu0 %v48
    %152 = vmatprep.subr.mxu0 0.0
    %153 = vmatpush1.msra.mxu0 %v47
    %154 = vmatprep.subr.mxu0 0.0
    %155 = vmatpush1.msra.mxu0 %v46
    %156 = vmatprep.subr.mxu0 0.0
    %157 = vmatpush1.msra.mxu0 %v45
    %158 = vmatprep.subr.mxu0 0.0
    %159 = vmatpush1.msra.mxu0 %v44
    %160 = vmatprep.subr.mxu0 0.0
    %161 = vmatpush1.msra.mxu0 %v43
    %162 = vmatprep.subr.mxu0 0.0
    %163 = vmatpush1.msra.mxu0 %v42
    %164 = vmatprep.subr.mxu0 0.0
    %165 = vmatpush1.msra.mxu0 %v41
    %166 = vmatprep.subr.mxu0 0.0
    %167 = vmatpush1.msra.mxu0 %v40
    %168 = vmatprep.subr.mxu0 0.0
    %169 = vmatpush1.msra.mxu0 %v39
    %170 = vmatprep.subr.mxu0 0.0
    %171 = vmatpush1.msra.mxu0 %v38
    %172 = vmatprep.subr.mxu0 0.0
    %173 = vmatpush2.msra.mxu0 %v69
    %174 = vmatprep.subr.mxu0 0.0
    %175 = vmatpush2.msra.mxu0 %v68
    %176 = vmatprep.subr.mxu0 0.0
    %177 = vmatpush2.msra.mxu0 %v67
    %178 = vmatprep.subr.mxu0 0.0
    %179 = vmatpush2.msra.mxu0 %v66
    %180 = vmatprep.subr.mxu0 0.0
    %181 = vmatpush2.msra.mxu0 %v65
    %182 = vmatprep.subr.mxu0 0.0
    %183 = vmatpush2.msra.mxu0 %v64
    %184 = vmatprep.subr.mxu0 0.0
    %185 = vmatpush2.msra.mxu0 %v63
    %186 = vmatprep.subr.mxu0 0.0
    %187 = vmatpush2.msra.mxu0 %v62
    %188 = vmatprep.subr.mxu0 0.0
    %189 = vmatpush2.msra.mxu0 %v61
    %190 = vmatprep.subr.mxu0 0.0
    %191 = vmatpush2.msra.mxu0 %v60
    %192 = vmatprep.subr.mxu0 0.0
    %193 = vmatpush2.msra.mxu0 %v59
    %194 = vmatprep.subr.mxu0 0.0
    %195 = vmatpush2.msra.mxu0 %v58
    %196 = vmatprep.subr.mxu0 0.0
    %197 = vmatpush2.msra.mxu0 %v57
    %198 = vmatprep.subr.mxu0 0.0
    %199 = vmatpush2.msra.mxu0 %v56
    %200 = vmatprep.subr.mxu0 0.0
    %201 = vmatpush2.msra.mxu0 %v55
    %202 = vmatprep.subr.mxu0 0.0
    %203 = vmatpush2.msra.mxu0 %v54
    %204 = vmatprep.mubr.f32.mxu0 %v29
    %205 = vmatmul.mubr.f32.gmra.mxu0 %v28
    %v206 = vpop.f32.mrf.mxu0
    %v207 = vadd.f32 0.0, %v206
    %v208 = vpop.f32.mrf.mxu0
    %209 = vdwg.mxu0
    %v210 = vmul.f32 %v22, %v22
    %v211 = vmul.f32 %v23, %v23
    %212 = vmatprep.subr.mxu0 0.0
    %213 = vmatpush1.msra.mxu0 %v53
    %214 = vmatprep.subr.mxu0 0.0
    %215 = vmatpush1.msra.mxu0 %v52
    %216 = vmatprep.subr.mxu0 0.0
    %217 = vmatpush1.msra.mxu0 %v51
    %218 = vmatprep.subr.mxu0 0.0
    %219 = vmatpush1.msra.mxu0 %v50
    %220 = vmatprep.subr.mxu0 0.0
    %221 = vmatpush1.msra.mxu0 %v49
    %222 = vmatprep.subr.mxu0 0.0
    %223 = vmatpush1.msra.mxu0 %v48
    %224 = vmatprep.subr.mxu0 0.0
    %225 = vmatpush1.msra.mxu0 %v47
    %226 = vmatprep.subr.mxu0 0.0
    %227 = vmatpush1.msra.mxu0 %v46
    %228 = vmatprep.subr.mxu0 0.0
    %229 = vmatpush1.msra.mxu0 %v45
    %230 = vmatprep.subr.mxu0 0.0
    %231 = vmatpush1.msra.mxu0 %v44
    %232 = vmatprep.subr.mxu0 0.0
    %233 = vmatpush1.msra.mxu0 %v43
    %234 = vmatprep.subr.mxu0 0.0
    %235 = vmatpush1.msra.mxu0 %v42
    %236 = vmatprep.subr.mxu0 0.0
    %237 = vmatpush1.msra.mxu0 %v41
    %238 = vmatprep.subr.mxu0 0.0
    %239 = vmatpush1.msra.mxu0 %v40
    %240 = vmatprep.subr.mxu0 0.0
    %241 = vmatpush1.msra.mxu0 %v39
    %242 = vmatprep.subr.mxu0 0.0
    %243 = vmatpush1.msra.mxu0 %v38
    %244 = vmatprep.subr.mxu0 0.0
    %245 = vmatpush2.msra.mxu0 %v69
    %246 = vmatprep.subr.mxu0 0.0
    %247 = vmatpush2.msra.mxu0 %v68
    %248 = vmatprep.subr.mxu0 0.0
    %249 = vmatpush2.msra.mxu0 %v67
    %250 = vmatprep.subr.mxu0 0.0
    %251 = vmatpush2.msra.mxu0 %v66
    %252 = vmatprep.subr.mxu0 0.0
    %253 = vmatpush2.msra.mxu0 %v65
    %254 = vmatprep.subr.mxu0 0.0
    %255 = vmatpush2.msra.mxu0 %v64
    %256 = vmatprep.subr.mxu0 0.0
    %257 = vmatpush2.msra.mxu0 %v63
    %258 = vmatprep.subr.mxu0 0.0
    %259 = vmatpush2.msra.mxu0 %v62
    %260 = vmatprep.subr.mxu0 0.0
    %261 = vmatpush2.msra.mxu0 %v61
    %262 = vmatprep.subr.mxu0 0.0
    %263 = vmatpush2.msra.mxu0 %v60
    %264 = vmatprep.subr.mxu0 0.0
    %265 = vmatpush2.msra.mxu0 %v59
    %266 = vmatprep.subr.mxu0 0.0
    %267 = vmatpush2.msra.mxu0 %v58
    %268 = vmatprep.subr.mxu0 0.0
    %269 = vmatpush2.msra.mxu0 %v57
    %270 = vmatprep.subr.mxu0 0.0
    %271 = vmatpush2.msra.mxu0 %v56
    %272 = vmatprep.subr.mxu0 0.0
    %273 = vmatpush2.msra.mxu0 %v55
    %274 = vmatprep.subr.mxu0 0.0
    %275 = vmatpush2.msra.mxu0 %v54
    %276 = vmatprep.mubr.f32.mxu0 %v211
    %277 = vmatmul.mubr.f32.gmra.mxu0 %v210
    %v278 = vpop.f32.mrf.mxu0
    %v279 = vadd.f32 0.0, %v278
    %v280 = vpop.f32.mrf.mxu0
    %281 = vdwg.mxu0
    %v282 = vmul.f32 %v28, %v28
    %v283 = vmul.f32 %v29, %v29
    %284 = vmatprep.subr.mxu0 0.0
    %285 = vmatpush1.msra.mxu0 %v53
    %286 = vmatprep.subr.mxu0 0.0
    %287 = vmatpush1.msra.mxu0 %v52
    %288 = vmatprep.subr.mxu0 0.0
    %289 = vmatpush1.msra.mxu0 %v51
    %290 = vmatprep.subr.mxu0 0.0
    %291 = vmatpush1.msra.mxu0 %v50
    %292 = vmatprep.subr.mxu0 0.0
    %293 = vmatpush1.msra.mxu0 %v49
    %294 = vmatprep.subr.mxu0 0.0
    %295 = vmatpush1.msra.mxu0 %v48
    %296 = vmatprep.subr.mxu0 0.0
    %297 = vmatpush1.msra.mxu0 %v47
    %298 = vmatprep.subr.mxu0 0.0
    %299 = vmatpush1.msra.mxu0 %v46
    %300 = vmatprep.subr.mxu0 0.0
    %301 = vmatpush1.msra.mxu0 %v45
    %302 = vmatprep.subr.mxu0 0.0
    %303 = vmatpush1.msra.mxu0 %v44
    %304 = vmatprep.subr.mxu0 0.0
    %305 = vmatpush1.msra.mxu0 %v43
    %306 = vmatprep.subr.mxu0 0.0
    %307 = vmatpush1.msra.mxu0 %v42
    %308 = vmatprep.subr.mxu0 0.0
    %309 = vmatpush1.msra.mxu0 %v41
    %310 = vmatprep.subr.mxu0 0.0
    %311 = vmatpush1.msra.mxu0 %v40
    %312 = vmatprep.subr.mxu0 0.0
    %313 = vmatpush1.msra.mxu0 %v39
    %314 = vmatprep.subr.mxu0 0.0
    %315 = vmatpush1.msra.mxu0 %v38
    %316 = vmatprep.subr.mxu0 0.0
    %317 = vmatpush2.msra.mxu0 %v69
    %318 = vmatprep.subr.mxu0 0.0
    %319 = vmatpush2.msra.mxu0 %v68
    %320 = vmatprep.subr.mxu0 0.0
    %321 = vmatpush2.msra.mxu0 %v67
    %322 = vmatprep.subr.mxu0 0.0
    %323 = vmatpush2.msra.mxu0 %v66
    %324 = vmatprep.subr.mxu0 0.0
    %325 = vmatpush2.msra.mxu0 %v65
    %326 = vmatprep.subr.mxu0 0.0
    %327 = vmatpush2.msra.mxu0 %v64
    %328 = vmatprep.subr.mxu0 0.0
    %329 = vmatpush2.msra.mxu0 %v63
    %330 = vmatprep.subr.mxu0 0.0
    %331 = vmatpush2.msra.mxu0 %v62
    %332 = vmatprep.subr.mxu0 0.0
    %333 = vmatpush2.msra.mxu0 %v61
    %334 = vmatprep.subr.mxu0 0.0
    %335 = vmatpush2.msra.mxu0 %v60
    %336 = vmatprep.subr.mxu0 0.0
    %337 = vmatpush2.msra.mxu0 %v59
    %338 = vmatprep.subr.mxu0 0.0
    %339 = vmatpush2.msra.mxu0 %v58
    %340 = vmatprep.subr.mxu0 0.0
    %341 = vmatpush2.msra.mxu0 %v57
    %342 = vmatprep.subr.mxu0 0.0
    %343 = vmatpush2.msra.mxu0 %v56
    %344 = vmatprep.subr.mxu0 0.0
    %345 = vmatpush2.msra.mxu0 %v55
    %346 = vmatprep.subr.mxu0 0.0
    %347 = vmatpush2.msra.mxu0 %v54
    %348 = vmatprep.mubr.f32.mxu0 %v283
    %349 = vmatmul.mubr.f32.gmra.mxu0 %v282
    %v350 = vpop.f32.mrf.mxu0
    %v351 = vadd.f32 0.0, %v350
    %v352 = vpop.f32.mrf.mxu0
    %353 = vdwg.mxu0
    %v354 = vmul.f32 %v22, %v28
    %v355 = vmul.f32 %v23, %v29
    %356 = vmatprep.subr.mxu0 0.0
    %357 = vmatpush1.msra.mxu0 %v53
    %358 = vmatprep.subr.mxu0 0.0
    %359 = vmatpush1.msra.mxu0 %v52
    %360 = vmatprep.subr.mxu0 0.0
    %361 = vmatpush1.msra.mxu0 %v51
    %362 = vmatprep.subr.mxu0 0.0
    %363 = vmatpush1.msra.mxu0 %v50
    %364 = vmatprep.subr.mxu0 0.0
    %365 = vmatpush1.msra.mxu0 %v49
    %366 = vmatprep.subr.mxu0 0.0
    %367 = vmatpush1.msra.mxu0 %v48
    %368 = vmatprep.subr.mxu0 0.0
    %369 = vmatpush1.msra.mxu0 %v47
    %370 = vmatprep.subr.mxu0 0.0
    %371 = vmatpush1.msra.mxu0 %v46
    %372 = vmatprep.subr.mxu0 0.0
    %373 = vmatpush1.msra.mxu0 %v45
    %374 = vmatprep.subr.mxu0 0.0
    %375 = vmatpush1.msra.mxu0 %v44
    %376 = vmatprep.subr.mxu0 0.0
    %377 = vmatpush1.msra.mxu0 %v43
    %378 = vmatprep.subr.mxu0 0.0
    %379 = vmatpush1.msra.mxu0 %v42
    %380 = vmatprep.subr.mxu0 0.0
    %381 = vmatpush1.msra.mxu0 %v41
    %382 = vmatprep.subr.mxu0 0.0
    %383 = vmatpush1.msra.mxu0 %v40
    %384 = vmatprep.subr.mxu0 0.0
    %385 = vmatpush1.msra.mxu0 %v39
    %386 = vmatprep.subr.mxu0 0.0
    %387 = vmatpush1.msra.mxu0 %v38
    %388 = vmatprep.subr.mxu0 0.0
    %389 = vmatpush2.msra.mxu0 %v69
    %390 = vmatprep.subr.mxu0 0.0
    %391 = vmatpush2.msra.mxu0 %v68
    %392 = vmatprep.subr.mxu0 0.0
    %393 = vmatpush2.msra.mxu0 %v67
    %394 = vmatprep.subr.mxu0 0.0
    %395 = vmatpush2.msra.mxu0 %v66
    %396 = vmatprep.subr.mxu0 0.0
    %397 = vmatpush2.msra.mxu0 %v65
    %398 = vmatprep.subr.mxu0 0.0
    %399 = vmatpush2.msra.mxu0 %v64
    %400 = vmatprep.subr.mxu0 0.0
    %401 = vmatpush2.msra.mxu0 %v63
    %402 = vmatprep.subr.mxu0 0.0
    %403 = vmatpush2.msra.mxu0 %v62
    %404 = vmatprep.subr.mxu0 0.0
    %405 = vmatpush2.msra.mxu0 %v61
    %406 = vmatprep.subr.mxu0 0.0
    %407 = vmatpush2.msra.mxu0 %v60
    %408 = vmatprep.subr.mxu0 0.0
    %409 = vmatpush2.msra.mxu0 %v59
    %410 = vmatprep.subr.mxu0 0.0
    %411 = vmatpush2.msra.mxu0 %v58
    %412 = vmatprep.subr.mxu0 0.0
    %413 = vmatpush2.msra.mxu0 %v57
    %414 = vmatprep.subr.mxu0 0.0
    %415 = vmatpush2.msra.mxu0 %v56
    %416 = vmatprep.subr.mxu0 0.0
    %417 = vmatpush2.msra.mxu0 %v55
    %418 = vmatprep.subr.mxu0 0.0
    %419 = vmatpush2.msra.mxu0 %v54
    %420 = vmatprep.mubr.f32.mxu0 %v355
    %421 = vmatmul.mubr.f32.gmra.mxu0 %v354
    %v422 = vpop.f32.mrf.mxu0
    %v423 = vadd.f32 0.0, %v422
    %v424 = vpop.f32.mrf.mxu0
    %425 = vdwg.mxu0
    %v426 = vmul.f32 %v137, %v137
    %v427 = vmul.f32 %v207, %v207
    %v428 = vmul.f32 %v137, %v207
    %v429 = vmul.f32 %v428, 2.0
    %v430 = vadd.f32 %v429, 0.0001
    %v431 = vsub.f32 %v423, %v428
    %v432 = vmul.f32 %v431, 2.0
    %v433 = vadd.f32 %v432, 0.0009
    %v434 = vmul.f32 %v430, %v433
    %v435 = vadd.f32 %v426, %v427
    %v436 = vadd.f32 %v435, 0.0001
    %v437 = vsub.f32 %v279, %v426
    %v438 = vsub.f32 %v351, %v427
    %v439 = vadd.f32 %v437, %v438
    %v440 = vadd.f32 %v439, 0.0009
    %v441 = vmul.f32 %v436, %v440
    %v442 = vrcp.pop %v441
    %v443 = vmul.f32 %v434, %v442
    %v444 = vadd.f32 %v443, 0.0
    %vm445 = vcmask 293888
    %446 = vst.msk [vmem:[#allocation4] sm:$0xff] %vm445, %v444
    // Predicated region
    $region14: #{tpu_custom_call.1} parent=1 // pred_check
      _
    $region15: #{tpu_custom_call.1} parent=1 // pred_check_branch
      %448 = sbr.rel (0) target = $region17
    $region16: #{tpu_custom_call.1} parent=1 // pred_region
      %s450 = ssub.s32 256, 256
      %451 = vsyncadd [#allocation3], %s450
      %s453 = sshll.u32 [#allocation2], 4
      %s454 = int_to_ptr.vmem [resolvable:$true] %s453
      %456 = dma.vmem_to_hbm [thread:$0]  %s454, 256, %s3, [#allocation3]
    $region17: #{tpu_custom_call.1} parent=1 // pred_fallthru
      _
    // Predicated region
    $region18: #{tpu_custom_call.1} parent=1 // pred_check
      _
    $region19: #{tpu_custom_call.1} parent=1 // pred_check_branch
      %458 = sbr.rel (0) target = $region21
    $region20: #{tpu_custom_call.1} parent=1 // pred_region
      %s460 = ssub.s32 128, 128
      %461 = vsyncadd [#allocation5], %s460
      %s463 = sshll.u32 [#allocation4], 4
      %s464 = int_to_ptr.vmem [resolvable:$true] %s463
      %466 = dma.vmem_to_hbm [thread:$0]  %s464, 128, %s4, [#allocation5]
    $region21: #{tpu_custom_call.1} parent=1 // pred_fallthru
      _
    // Predicated region
    $region22: #{tpu_custom_call.1} parent=1 // pred_check
      _
    $region23: #{tpu_custom_call.1} parent=1 // pred_check_branch
      %468 = sbr.rel (0) target = $region25
    $region24: #{tpu_custom_call.1} parent=1 // pred_region
      %469 = dma.done [#allocation3], 256
    $region25: #{tpu_custom_call.1} parent=1 // pred_fallthru
      _
    // Predicated region
    $region26: #{tpu_custom_call.1} parent=1 // pred_check
      _
    $region27: #{tpu_custom_call.1} parent=1 // pred_check_branch
      %471 = sbr.rel (0) target = $region29
    $region28: #{tpu_custom_call.1} parent=1 // pred_region
      %472 = dma.done [#allocation5], 128
    $region29: #{tpu_custom_call.1} parent=1 // pred_fallthru
      _
    %473 = vsyncpa [#allocation3], 1
    %474 = vsyncpa [#allocation5], 1

</llo_original>
